<compile_context>
chip_gen: v5e
topology: v5e:2x2
jax: 0.10.0
libtpu: 0.0.40
codegen_flags: <defaults>
</compile_context>

<pallas_src>
import functools
import math

import jax
import jax.numpy as jnp
from jax import lax
from jax.experimental import pallas as pl
from jax.experimental.pallas import tpu as pltpu


def _cdiv(a, b):
    return -(-a // b)


def _round_up(a, b):
    return _cdiv(a, b) * b


def _round_down(a, b):
    return (a // b) * b


def _num_tensorcores():
    """TensorCores addressable by one pallas_call (v5e/v6e: 1, v7x: 2)."""
    try:
        info = pltpu.get_tpu_info()
        for name in ("num_cores", "core_count", "tensorcore_count", "num_tensorcores"):
            v = getattr(info, name, None)
            if v is not None:
                v = int(v)
                if 1 <= v <= 8:
                    return v
    except Exception:
        pass
    try:
        kind = jax.devices()[0].device_kind.lower()
        if "v7" in kind or "7x" in kind:
            return 2
    except Exception:
        pass
    return 1


def _target_block_bytes():
    """Per-input bytes per grid step; smaller on v5e (16 MiB scoped-VMEM default)."""
    try:
        kind = jax.devices()[0].device_kind.lower()
        if "v5e" in kind or ("v5" in kind and "lite" in kind):
            return 2 << 20
    except Exception:
        pass
    return 4 << 20


def _softplus_sum(ap, an):
    """Plain-XLA fallback / tail path: sum(softplus(an - ap)) in f32."""
    d = an.astype(jnp.float32) - ap.astype(jnp.float32)
    return jnp.sum(jnp.maximum(d, 0.0) + jnp.log1p(jnp.exp(-jnp.abs(d))))


def _siamese_loss_kernel(ap_ref, an_ref, out_ref, acc_ref, *, rows, steps, needs_mask):
    """Per-tile body: accumulate sum(softplus(an - ap)) into acc_ref."""
    s = pl.program_id(1)

    @pl.when(s == 0)
    def _():
        acc_ref[...] = jnp.zeros_like(acc_ref)

    ap = ap_ref[...].astype(jnp.float32)
    an = an_ref[...].astype(jnp.float32)
    d = an - ap
    # Numerically stable softplus; log(1+x) (not log1p) for guaranteed Mosaic lowering.
    val = jnp.maximum(d, 0.0) + jnp.log(1.0 + jnp.exp(-jnp.abs(d)))

    tile_rows, cols = val.shape
    if needs_mask:  # static Python bool: only emitted when the row range is ragged
        bidx = pl.program_id(0) * steps + s
        limit = rows - bidx * tile_rows          # <= 0 for duplicated trailing blocks
        row_id = lax.broadcasted_iota(jnp.int32, (tile_rows, 1), 0)
        val = jnp.where(row_id < limit, val, 0.0)

    # Cheap VPU partial reduce into the resident (sub, cols) accumulator; the
    # expensive cross-lane/sublane XLU reduce is deferred to the last step.
    sub = acc_ref.shape[0]
    acc_ref[...] += jnp.sum(val.reshape(tile_rows // sub, sub, cols), axis=0)

    @pl.when(s == steps - 1)
    def _():
        psum = jnp.sum(acc_ref[...])
        # Broadcast the per-core partial sum into a lane-dense (8,128) block.
        out_ref[...] = jnp.zeros(out_ref.shape, out_ref.dtype) + psum


def siamese_softmax_loss(score_ap, score_an, *, min_kernel_elems=1 << 16, block_rows=None):
    """Pallas equivalent of MetrciSoftmaxLoss_Siamese()(score_ap, score_an)."""
    assert score_ap.shape == score_an.shape, "scores must have identical shapes"
    total = int(math.prod(score_ap.shape))
    if total == 0:
        return jnp.float32(0.0)

    ap = jnp.reshape(score_ap, (-1,))
    an = jnp.reshape(score_an, (-1,))

    # Small-input fast path: pallas_call launch + pipeline prologue would dominate.
    if total < min_kernel_elems:
        return _softplus_sum(ap, an)

    itemsize = jnp.dtype(score_ap.dtype).itemsize
    sub = max(8, 32 // itemsize)  # sublane packing: 8 f32, 16 bf16/f16, 32 int8/fp8

    # Lane-dense column count that divides total -> zero-copy reshape, no padding.
    cols = next((c for c in (1024, 512, 256, 128) if total % c == 0), None)

    tail_loss = None
    if cols is None:
        # Ragged total: fold the <128-element remainder in plain XLA; the
        # 128-aligned prefix goes through the kernel (one small prefix slice).
        cols = 128
        main = _round_down(total, cols)
        if main // cols < sub:
            return _softplus_sum(ap, an)
        tail_loss = _softplus_sum(ap[main:], an[main:])
        ap, an = ap[:main], an[:main]
        total = main

    rows = total // cols
    if rows < sub:
        loss = _softplus_sum(ap, an)
        return loss if tail_loss is None else loss + tail_loss

    ap2d = ap.reshape(rows, cols)   # free reshape (total % cols == 0)
    an2d = an.reshape(rows, cols)

    if block_rows is None:
        block_rows = max(sub, _target_block_bytes() // (cols * itemsize))
    tile_rows = max(sub, min(_round_up(block_rows, sub), _round_down(rows, sub)))
    nblocks = _cdiv(rows, tile_rows)
    ncores = max(1, min(_num_tensorcores(), nblocks))
    steps = _cdiv(nblocks, ncores)
    needs_mask = (rows % tile_rows != 0) or (ncores * steps != nblocks)

    last_block = nblocks - 1
    if ncores * steps == nblocks:
        in_index_map = lambda c, s: (c * steps + s, 0)
    else:
        # Clamp duplicated trailing steps onto the last valid block; the
        # in-kernel mask zeroes their contribution (no fully-OOB DMAs).
        in_index_map = lambda c, s: (jnp.minimum(c * steps + s, last_block), 0)

    in_spec = pl.BlockSpec((tile_rows, cols), in_index_map)
    out_spec = pl.BlockSpec((8, 128), lambda c, s: (c, 0))

    kernel = functools.partial(_siamese_loss_kernel, rows=rows, steps=steps,
                               needs_mask=needs_mask)

    block_bytes = tile_rows * cols * itemsize
    # 2 inputs x 2 pipeline buffers x block + small scratch/output + headroom.
    vmem_limit = int(min(64 << 20, max(16 << 20, 4 * block_bytes + (2 << 20))))

    cost = pl.CostEstimate(
        flops=7 * rows * cols,
        transcendentals=2 * rows * cols,
        bytes_accessed=2 * rows * cols * itemsize + ncores * 8 * 128 * 4,
    )

    out = pl.pallas_call(
        kernel,
        out_shape=jax.ShapeDtypeStruct((ncores * 8, 128), jnp.float32),
        grid=(ncores, steps),
        in_specs=[in_spec, in_spec],
        out_specs=out_spec,
        scratch_shapes=[pltpu.VMEM((sub, cols), jnp.float32)],
        compiler_params=pltpu.CompilerParams(
            dimension_semantics=("parallel", "arbitrary"),
            vmem_limit_bytes=vmem_limit,
        ),
        cost_estimate=cost,
    )(ap2d, an2d)

    loss = out.reshape(ncores, 8, 128)[:, 0, 0].sum()
    return loss if tail_loss is None else loss + tail_loss


def _reference(score_ap, score_an):
    e_an = jnp.exp(1.0 - score_an)
    e_ap = jnp.exp(1.0 - score_ap)
    return -jnp.sum(jnp.log(e_an / (e_an + e_ap)))


if __name__ == "__main__":
    key = jax.random.PRNGKey(0)
    k1, k2, k3, k4, k5, k6, k7, k8 = jax.random.split(key, 8)

    # Case 1: small siamese batch of pair scores (batch=2, 16 scores each).
    # Exercises both the fast path (default threshold) and the forced wrapper path.
    ap1 = jax.random.uniform(k1, (2, 16), jnp.float32, minval=-1.0, maxval=1.0)
    an1 = jax.random.uniform(k2, (2, 16), jnp.float32, minval=-1.0, maxval=1.0)
    ref1 = _reference(ap1, an1)
    loss1_fast = siamese_softmax_loss(ap1, an1)
    loss1_forced = siamese_softmax_loss(ap1, an1, min_kernel_elems=0)
    jax.block_until_ready((loss1_fast, loss1_forced))
    assert jnp.allclose(loss1_fast, ref1, rtol=1e-4, atol=1e-3), (loss1_fast, ref1)
    assert jnp.allclose(loss1_forced, ref1, rtol=1e-4, atol=1e-3), (loss1_forced, ref1)

    # Case 2: odd-sized input -> ragged-total path (jnp tail + row-masked kernel).
    ap2 = jax.random.uniform(k3, (9, 333), jnp.float32, minval=-1.0, maxval=1.0)
    an2 = jax.random.uniform(k4, (9, 333), jnp.float32, minval=-1.0, maxval=1.0)
    loss2 = siamese_softmax_loss(ap2, an2, min_kernel_elems=0)
    jax.block_until_ready(loss2)
    ref2 = _reference(ap2, an2)
    assert jnp.allclose(loss2, ref2, rtol=1e-4, atol=1e-3), (loss2, ref2)

    # Case 3: lane-dense f32 input, multi-step grid, no masking, zero-copy reshape.
    ap3 = jax.random.uniform(k5, (48, 1024), jnp.float32, minval=-1.0, maxval=1.0)
    an3 = jax.random.uniform(k6, (48, 1024), jnp.float32, minval=-1.0, maxval=1.0)
    loss3 = siamese_softmax_loss(ap3, an3, min_kernel_elems=0, block_rows=16)
    jax.block_until_ready(loss3)
    ref3 = _reference(ap3, an3)
    assert jnp.allclose(loss3, ref3, rtol=1e-3, atol=1e-2), (loss3, ref3)

    # Case 4: bf16 inputs streamed in native dtype (16-row sublane packing) with
    # a ragged row count exercising the in-kernel row mask.
    ap4 = jax.random.uniform(k7, (40, 1024), jnp.float32, minval=-1.0, maxval=1.0).astype(jnp.bfloat16)
    an4 = jax.random.uniform(k8, (40, 1024), jnp.float32, minval=-1.0, maxval=1.0).astype(jnp.bfloat16)
    loss4 = siamese_softmax_loss(ap4, an4, min_kernel_elems=0, block_rows=16)
    jax.block_until_ready(loss4)
    ref4 = _reference(ap4.astype(jnp.float32), an4.astype(jnp.float32))
    assert jnp.allclose(loss4, ref4, rtol=1e-3, atol=1e-2), (loss4, ref4)

    print("KERNEL_OK")
</pallas_src>

<mosaic_0001>
module attributes {stable_mosaic.version = 11 : i64} {
  func.func @_siamese_loss_kernel(%arg0: i32, %arg1: i32, %arg2: memref<16x128xf32, #tpu.memory_space<vmem>>, %arg3: memref<16x128xf32, #tpu.memory_space<vmem>>, %arg4: memref<8x128xf32, #tpu.memory_space<vmem>>, %arg5: memref<8x128xf32, #tpu.memory_space<vmem>>) attributes {dimension_semantics = [#tpu.dimension_semantics<parallel>, #tpu.dimension_semantics<arbitrary>], iteration_bounds = array<i64: 1, 2>, scalar_prefetch = 0 : i64, scratch_operands = 1 : i64, tpu.core_type = #tpu.core_type<tc>, window_params = [{transform_indices = @transform_0, window_bounds = array<i64: 16, 128>}, {transform_indices = @transform_1, window_bounds = array<i64: 16, 128>}, {transform_indices = @transform_2, window_bounds = array<i64: 8, 128>}]} {
    %c0_i32 = arith.constant 0 : i32
    %0 = arith.cmpi eq, %arg1, %c0_i32 : i32
    %1 = arith.extui %0 : i1 to i32
    %c0_i32_0 = arith.constant 0 : i32
    %2 = arith.cmpi ne, %1, %c0_i32_0 : i32
    scf.if %2 {
      %cst_13 = arith.constant 0.000000e+00 : f32
      %35 = vector.broadcast %cst_13 : f32 to vector<8x128xf32>
      %c0_14 = arith.constant 0 : index
      %c0_15 = arith.constant 0 : index
      %36 = vector.load %arg5[%c0_14, %c0_15] : memref<8x128xf32, #tpu.memory_space<vmem>>, vector<8x128xf32>
      tpu.vector_store %arg5[%c0_14, %c0_15], %35 {strides = array<i32>} : memref<8x128xf32, #tpu.memory_space<vmem>>, vector<8x128xf32>,
    } else {
    }
    %c0 = arith.constant 0 : index
    %c0_1 = arith.constant 0 : index
    %3 = vector.load %arg2[%c0, %c0_1] : memref<16x128xf32, #tpu.memory_space<vmem>>, vector<16x128xf32>
    %c0_2 = arith.constant 0 : index
    %c0_3 = arith.constant 0 : index
    %4 = vector.load %arg3[%c0_2, %c0_3] : memref<16x128xf32, #tpu.memory_space<vmem>>, vector<16x128xf32>
    %5 = arith.subf %4, %3 : vector<16x128xf32>
    %cst = arith.constant 0.000000e+00 : f32
    %6 = vector.broadcast %cst : f32 to vector<16x128xf32>
    %7 = arith.maximumf %5, %6 : vector<16x128xf32>
    %8 = math.absf %5 : vector<16x128xf32>
    %cst_4 = arith.constant 0.000000e+00 : f32
    %9 = vector.broadcast %cst_4 : f32 to vector<16x128xf32>
    %10 = arith.subf %9, %8 : vector<16x128xf32>
    %11 = math.exp %10 : vector<16x128xf32>
    %cst_5 = arith.constant 1.000000e+00 : f32
    %12 = vector.broadcast %cst_5 : f32 to vector<16x128xf32>
    %13 = arith.addf %12, %11 : vector<16x128xf32>
    %14 = math.log %13 : vector<16x128xf32>
    %15 = arith.addf %7, %14 : vector<16x128xf32>
    %c2_i32 = arith.constant 2 : i32
    %16 = arith.muli %arg0, %c2_i32 : i32
    %17 = arith.addi %16, %arg1 : i32
    %c16_i32 = arith.constant 16 : i32
    %18 = arith.muli %17, %c16_i32 : i32
    %c23_i32 = arith.constant 23 : i32
    %19 = arith.subi %c23_i32, %18 : i32
    %20 = tpu.iota {dimensions = array<i32: 0>} : vector<16x1xi32>
    %21 = vector.broadcast %19 : i32 to vector<16x1xi32>
    %22 = arith.cmpi slt, %20, %21 : vector<16x1xi32>
    %cst_6 = arith.constant 0.000000e+00 : f32
    %23 = vector.shape_cast %22 : vector<16x1xi1> to vector<16x1xi1>
    %24 = vector.broadcast %23 : vector<16x1xi1> to vector<16x128xi1>
    %25 = vector.broadcast %cst_6 : f32 to vector<16x128xf32>
    %26 = arith.select %24, %15, %25 : vector<16x128xi1>, vector<16x128xf32>
    %c0_7 = arith.constant 0 : index
    %c0_8 = arith.constant 0 : index
    %27 = vector.load %arg5[%c0_7, %c0_8] : memref<8x128xf32, #tpu.memory_space<vmem>>, vector<8x128xf32>
    %28 = vector.shape_cast %26 : vector<16x128xf32> to vector<2x8x128xf32>
    %cst_9 = arith.constant dense<0.000000e+00> : vector<8x128xf32>
    %29 = vector.multi_reduction <add>, %28, %cst_9 [0] : vector<2x8x128xf32> to vector<8x128xf32>
    %30 = arith.addf %27, %29 : vector<8x128xf32>
    %c0_10 = arith.constant 0 : index
    %c0_11 = arith.constant 0 : index
    %31 = vector.load %arg5[%c0_10, %c0_11] : memref<8x128xf32, #tpu.memory_space<vmem>>, vector<8x128xf32>
    tpu.vector_store %arg5[%c0_10, %c0_11], %30 {strides = array<i32>} : memref<8x128xf32, #tpu.memory_space<vmem>>, vector<8x128xf32>,
    %c1_i32 = arith.constant 1 : i32
    %32 = arith.cmpi eq, %arg1, %c1_i32 : i32
    %33 = arith.extui %32 : i1 to i32
    %c0_i32_12 = arith.constant 0 : i32
    %34 = arith.cmpi ne, %33, %c0_i32_12 : i32
    scf.if %34 {
      %c0_13 = arith.constant 0 : index
      %c0_14 = arith.constant 0 : index
      %35 = vector.load %arg5[%c0_13, %c0_14] : memref<8x128xf32, #tpu.memory_space<vmem>>, vector<8x128xf32>
      %36 = vector.shape_cast %35 : vector<8x128xf32> to vector<1x8x128xf32>
      %cst_15 = arith.constant dense<0.000000e+00> : vector<1xf32>
      %37 = vector.multi_reduction <add>, %36, %cst_15 [1, 2] : vector<1x8x128xf32> to vector<1xf32>
      %38 = vector.shape_cast %37 : vector<1xf32> to vector<1x1x1xf32>
      %39 = vector.extract %38[0, 0, 0] : f32 from vector<1x1x1xf32>
      %cst_16 = arith.constant 0.000000e+00 : f32
      %40 = vector.broadcast %cst_16 : f32 to vector<8x128xf32>
      %41 = vector.broadcast %39 : f32 to vector<8x128xf32>
      %42 = arith.addf %40, %41 : vector<8x128xf32>
      %c0_17 = arith.constant 0 : index
      %c0_18 = arith.constant 0 : index
      %43 = vector.load %arg4[%c0_17, %c0_18] : memref<8x128xf32, #tpu.memory_space<vmem>>, vector<8x128xf32>
      tpu.vector_store %arg4[%c0_17, %c0_18], %42 {strides = array<i32>} : memref<8x128xf32, #tpu.memory_space<vmem>>, vector<8x128xf32>,
    } else {
    }
    return
  }
  func.func @transform_0(%arg0: i32, %arg1: i32) -> (i32, i32) {
    %c2_i32 = arith.constant 2 : i32
    %0 = arith.muli %arg0, %c2_i32 : i32
    %1 = arith.addi %0, %arg1 : i32
    %c0_i32 = arith.constant 0 : i32
    %c0_i32_0 = arith.constant 0 : i32
    return %1, %c0_i32 : i32, i32
  }
  func.func @transform_1(%arg0: i32, %arg1: i32) -> (i32, i32) {
    %c2_i32 = arith.constant 2 : i32
    %0 = arith.muli %arg0, %c2_i32 : i32
    %1 = arith.addi %0, %arg1 : i32
    %c0_i32 = arith.constant 0 : i32
    %c0_i32_0 = arith.constant 0 : i32
    return %1, %c0_i32 : i32, i32
  }
  func.func @transform_2(%arg0: i32, %arg1: i32) -> (i32, i32) {
    %c0_i32 = arith.constant 0 : i32
    %c0_i32_0 = arith.constant 0 : i32
    return %arg0, %c0_i32 : i32, i32
  }
}

</mosaic_0001>

<llo_original>
// kernel: tpu_custom_call.1
$region0: #{tpu_custom_call.1}
  #allocation0 [shape = 'u32[]', space=smem, size = 0x4, offset = 0x4, fixed_abs, tag = 'smem constant byte address 0x4 - core index']
  #allocation1 [shape = 'u32[72,128]{1,0:T(1,128)}', space=vmem, size = 0x9000, scoped, tag = 'internal scratch']
  #allocation2 [shape = 'f32[8,128]{1,0:T(8,128)}', space=vmem, size = 0x1000, scoped, tag = 'scratch operand']
  %s0 = inlined_call_operand.hbm [shape: f32[23,128], index: 0, kind: input, shape index: {}]
  %s1 = inlined_call_operand.hbm [shape: f32[23,128], index: 1, kind: input, shape index: {}]
  %s2 = inlined_call_operand.hbm [shape: f32[8,128], index: 2, kind: output, shape index: {}]
  %s3 = sld [smem:[#allocation0]]
  $region57: #{tpu_custom_call.1} parent=0
    _
  %s5 = ssub.s32 1, %s3
  %s6 = scalar_select 0, %s5, %s3
  $region1: #{tpu_custom_call.1} parent=0
    #allocation3 [shape = 'u8[16384]{0}', space=vmem, size = 0x4000, scoped, tag = 'input window, operand 0']
    #allocation4 [shape = 's32[2]{0}', space=sflag, size = 0x8, scoped, tag = 'scoped memory for tpu_custom_call.1']
    #allocation5 [shape = 's32[2]{0}', space=sflag, size = 0x8, scoped, tag = 'scoped memory for tpu_custom_call.1']
    #allocation6 [shape = 'u8[16384]{0}', space=vmem, size = 0x4000, scoped, tag = 'input window, operand 1']
    #allocation7 [shape = 's32[2]{0}', space=sflag, size = 0x8, scoped, tag = 'scoped memory for tpu_custom_call.1']
    #allocation8 [shape = 'u8[4096]{0}', space=vmem, size = 0x1000, scoped, tag = 'output window, operand 0, single buffered']
    %7 = vsyncpa [#allocation4], 0
    %s8 = scalar_lea.sflag [#allocation4], 1
    %9 = vsyncpa %s8, 0
    %10 = vsyncpa [#allocation7], 0
    %s11 = scalar_lea.sflag [#allocation7], 1
    %12 = vsyncpa %s11, 0
    %13 = vsyncpa [#allocation5], 0
    loop: start=0, step=1, limit=4
    $region2: #{tpu_custom_call.1} parent=1 // loop_pre_header
      _
    $region3: #{tpu_custom_call.1} parent=1 // loop_header
      %s15 = sphi 0, %s19
      %p16 = scmp.ge.s32.totalorder %s15, 4
      %s22 = sphi 0, %s34
      %s23 = sphi 0, %s30
      %s24 = sphi 0, %s22
      %s25 = sphi 0, %s23
      %s26 = sphi 0, %s24
      %s27 = sphi 0, %s25
      %s41 = sphi 0, %s43
      %s44 = sphi 0, %s41
      %s45 = sphi 0, %s44
      %s61 = sphi 0, %s45
      %s71 = sphi 0, %s73
      %s74 = sphi 0, %s71
      %s75 = sphi 0, %s74
      %s91 = sphi 0, %s75
      %s97 = sphi 0, %s99
      %s100 = sphi 0, %s97
      %s101 = sphi 0, %s100
      %s117 = sphi 0, %s101
    $region4: #{tpu_custom_call.1} parent=1 // loop_header_branch
      %18 = sbr.rel (%p16) target = $region8
    $region5: #{tpu_custom_call.1} parent=1 // loop_body
      %s20 = ssub.s32 %s15, 1
      %s21 = ssub.s32 %s15, 2
      %s28 = sadd.s32 1, %s23
      %p29 = scmp.ge.s32.totalorder %s28, 2
      %s30 = scalar_select %p29, 0, %s28
      %s31 = sadd.s32 1, %s22
      %s32 = scalar_select %p29, %s31, %s22
      %p33 = scmp.ge.s32.totalorder %s32, 1
      %s34 = scalar_select %p33, 0, %s32
      %s35 = smul.u32 %s22, 2
      %s36 = sadd.s32 %s35, %s23
      %s37 = smul.u32 %s34, 2
      %s38 = sadd.s32 %s37, %s30
      %s39 = ssub.s32 %s36, %s38
      %p40 = scmp.eq.s32.totalorder %s39, 0
      %s42 = sadd.s32 %s41, 1
      %s43 = scalar_select %p40, %s41, %s42
      %p46 = pneg %p40
      %p47 = scmp.eq.s32.totalorder %s15, 1
      %p48 = por %p46, %p47
      %p49 = scmp.ne.s32.totalorder %s41, %s44
      %p50 = scmp.eq.s32.totalorder %s15, 0
      %p51 = por %p49, %p50
      %p52 = scmp.ne.s32.totalorder %s41, %s44
      %p53 = scmp.eq.s32.totalorder %s20, 1
      %p54 = por %p52, %p53
      %p55 = scmp.ne.s32.totalorder %s44, %s45
      %p56 = scmp.eq.s32.totalorder %s20, 0
      %p57 = por %p55, %p56
      %p58 = scmp.ne.s32.totalorder %s44, %s45
      %p59 = scmp.eq.s32.totalorder %s21, 1
      %p60 = por %p58, %p59
      %p62 = scmp.ne.s32.totalorder %s45, %s61
      %p63 = scmp.eq.s32.totalorder %s21, 0
      %p64 = por %p62, %p63
      %s65 = smul.u32 %s22, 2
      %s66 = sadd.s32 %s65, %s23
      %s67 = smul.u32 %s34, 2
      %s68 = sadd.s32 %s67, %s30
      %s69 = ssub.s32 %s66, %s68
      %p70 = scmp.eq.s32.totalorder %s69, 0
      %s72 = sadd.s32 %s71, 1
      %s73 = scalar_select %p70, %s71, %s72
      %p76 = pneg %p70
      %p77 = scmp.eq.s32.totalorder %s15, 1
      %p78 = por %p76, %p77
      %p79 = scmp.ne.s32.totalorder %s71, %s74
      %p80 = scmp.eq.s32.totalorder %s15, 0
      %p81 = por %p79, %p80
      %p82 = scmp.ne.s32.totalorder %s71, %s74
      %p83 = scmp.eq.s32.totalorder %s20, 1
      %p84 = por %p82, %p83
      %p85 = scmp.ne.s32.totalorder %s74, %s75
      %p86 = scmp.eq.s32.totalorder %s20, 0
      %p87 = por %p85, %p86
      %p88 = scmp.ne.s32.totalorder %s74, %s75
      %p89 = scmp.eq.s32.totalorder %s21, 1
      %p90 = por %p88, %p89
      %p92 = scmp.ne.s32.totalorder %s75, %s91
      %p93 = scmp.eq.s32.totalorder %s21, 0
      %p94 = por %p92, %p93
      %s95 = ssub.s32 %s22, %s34
      %p96 = scmp.eq.s32.totalorder %s95, 0
      %s98 = sadd.s32 %s97, 1
      %s99 = scalar_select %p96, %s97, %s98
      %p102 = pneg %p96
      %p103 = scmp.eq.s32.totalorder %s15, 1
      %p104 = por %p102, %p103
      %p105 = scmp.ne.s32.totalorder %s97, %s100
      %p106 = scmp.eq.s32.totalorder %s15, 0
      %p107 = por %p105, %p106
      %p108 = scmp.ne.s32.totalorder %s97, %s100
      %p109 = scmp.eq.s32.totalorder %s20, 1
      %p110 = por %p108, %p109
      %p111 = scmp.ne.s32.totalorder %s100, %s101
      %p112 = scmp.eq.s32.totalorder %s20, 0
      %p113 = por %p111, %p112
      %p114 = scmp.ne.s32.totalorder %s100, %s101
      %p115 = scmp.eq.s32.totalorder %s21, 1
      %p116 = por %p114, %p115
      %p118 = scmp.ne.s32.totalorder %s101, %s117
      %p119 = scmp.eq.s32.totalorder %s21, 0
      %p120 = por %p118, %p119
      %p121 = scmp.le.s32.totalorder 1, %s15
      %p122 = scmp.lt.s32.totalorder %s15, 3
      %p123 = pnand %p121, %p122
      %p124 = pneg %p123
      // Predicated region
      $region9: #{tpu_custom_call.1} parent=5 // pred_check
        _
      $region10: #{tpu_custom_call.1} parent=5 // pred_check_branch
        %126 = sbr.rel (%p123) target = $region12
      $region11: #{tpu_custom_call.1} parent=5 // pred_region
        %s127 = ssub.s32 %s15, 1
      $region12: #{tpu_custom_call.1} parent=5 // pred_fallthru
        _
      %p128 = scmp.lt.s32.totalorder %s15, 2
      // Predicated region
      $region13: #{tpu_custom_call.1} parent=5 // pred_check
        %p129 = pneg %p128
      $region14: #{tpu_custom_call.1} parent=5 // pred_check_branch
        %131 = sbr.rel (%p129) target = $region16
      $region15: #{tpu_custom_call.1} parent=5 // pred_region
        // Predicated region
        $region17: #{tpu_custom_call.1} parent=15 // pred_check
          %p132 = pneg %p51
        $region18: #{tpu_custom_call.1} parent=15 // pred_check_branch
          %134 = sbr.rel (%p132) target = $region20
        $region19: #{tpu_custom_call.1} parent=15 // pred_region
          %s135 = sand.u32 %s41, 1
          %s136 = scalar_lea.sflag [#allocation4], %s135
          %s137 = sand.u32 %s41, 1
          %s138 = smul.addr %s137, 16
          %s139 = scalar_lea.vmem [#allocation3], %s138
          %s140 = smul.u32 %s22, 2
          %s141 = sadd.s32 %s140, %s23
          %s142 = smul.u32 2, %s141
          %s143 = ssub.s32 3, %s142
          %p144 = scmp.lt.s32.totalorder %s143, 2
          %s145 = scalar_select %p144, %s143, 2
          %s146 = smul.u32 8, %s145
          %s147 = ssub.s32 16, %s146
          %s148 = sshll.u32 %s147, 4
          %149 = vsyncadd %s136, %s148
          %p150 = scmp.ne.s32.totalorder 0, %s146
          %s151 = smul.addr %s142, 8
          %s152 = scalar_lea.hbm %s0, %s151
          %s153 = smul.u32 8, %s145
          %s154 = sshll.u32 %s152, 4
          %s155 = int_to_ptr.hbm [resolvable:$true] %s154
          %s156 = sshll.u32 %s139, 4
          %s157 = int_to_ptr.vmem [resolvable:$true] %s156
          %s158 = sshll.u32 %s153, 4
          %162 = dma.hbm_to_vmem [thread:$0]  (%p150), %s155, %s158, %s157, %s136, 128, 128, 8
        $region20: #{tpu_custom_call.1} parent=15 // pred_fallthru
          _
        // Predicated region
        $region21: #{tpu_custom_call.1} parent=15 // pred_check
          %p163 = pneg %p81
        $region22: #{tpu_custom_call.1} parent=15 // pred_check_branch
          %165 = sbr.rel (%p163) target = $region24
        $region23: #{tpu_custom_call.1} parent=15 // pred_region
          %s166 = sand.u32 %s71, 1
          %s167 = scalar_lea.sflag [#allocation7], %s166
          %s168 = sand.u32 %s71, 1
          %s169 = smul.addr %s168, 16
          %s170 = scalar_lea.vmem [#allocation6], %s169
          %s171 = smul.u32 %s22, 2
          %s172 = sadd.s32 %s171, %s23
          %s173 = smul.u32 2, %s172
          %s174 = ssub.s32 3, %s173
          %p175 = scmp.lt.s32.totalorder %s174, 2
          %s176 = scalar_select %p175, %s174, 2
          %s177 = smul.u32 8, %s176
          %s178 = ssub.s32 16, %s177
          %s179 = sshll.u32 %s178, 4
          %180 = vsyncadd %s167, %s179
          %p181 = scmp.ne.s32.totalorder 0, %s177
          %s182 = smul.addr %s173, 8
          %s183 = scalar_lea.hbm %s1, %s182
          %s184 = smul.u32 8, %s176
          %s185 = sshll.u32 %s183, 4
          %s186 = int_to_ptr.hbm [resolvable:$true] %s185
          %s187 = sshll.u32 %s170, 4
          %s188 = int_to_ptr.vmem [resolvable:$true] %s187
          %s189 = sshll.u32 %s184, 4
          %193 = dma.hbm_to_vmem [thread:$0]  (%p181), %s186, %s189, %s188, %s167, 128, 128, 8
        $region24: #{tpu_custom_call.1} parent=15 // pred_fallthru
          _
      $region16: #{tpu_custom_call.1} parent=5 // pred_fallthru
        _
      %p194 = scmp.le.s32.totalorder 1, %s15
      %p195 = scmp.lt.s32.totalorder %s15, 3
      %p196 = pnand %p194, %p195
      %p197 = pneg %p196
      // Predicated region
      $region25: #{tpu_custom_call.1} parent=5 // pred_check
        _
      $region26: #{tpu_custom_call.1} parent=5 // pred_check_branch
        %199 = sbr.rel (%p196) target = $region28
      $region27: #{tpu_custom_call.1} parent=5 // pred_region
        %s200 = ssub.s32 %s15, 1
        %s201 = sand.u32 %s44, 1
        %s202 = scalar_lea.sflag [#allocation4], %s201
        %s203 = sand.u32 %s44, 1
        %s204 = smul.addr %s203, 16
        %s205 = scalar_lea.vmem [#allocation3], %s204
        // Predicated region
        $region29: #{tpu_custom_call.1} parent=27 // pred_check
          %p206 = pneg %p57
        $region30: #{tpu_custom_call.1} parent=27 // pred_check_branch
          %208 = sbr.rel (%p206) target = $region32
        $region31: #{tpu_custom_call.1} parent=27 // pred_region
          %210 = dma.done %s202, 256
        $region32: #{tpu_custom_call.1} parent=27 // pred_fallthru
          _
        %s211 = sand.u32 %s74, 1
        %s212 = scalar_lea.sflag [#allocation7], %s211
        %s213 = sand.u32 %s74, 1
        %s214 = smul.addr %s213, 16
        %s215 = scalar_lea.vmem [#allocation6], %s214
        // Predicated region
        $region33: #{tpu_custom_call.1} parent=27 // pred_check
          %p216 = pneg %p87
        $region34: #{tpu_custom_call.1} parent=27 // pred_check_branch
          %218 = sbr.rel (%p216) target = $region36
        $region35: #{tpu_custom_call.1} parent=27 // pred_region
          %220 = dma.done %s212, 256
        $region36: #{tpu_custom_call.1} parent=27 // pred_fallthru
          _
        %s221 = sand.u32 %s44, 1
        %s222 = scalar_lea.sflag [#allocation4], %s221
        %s223 = sand.u32 %s44, 1
        %s224 = smul.addr %s223, 16
        %s225 = scalar_lea.vmem [#allocation3], %s224
        %p226 = pneg %p57
        %p227 = pneg %p54
        %s228 = sand.u32 %s74, 1
        %s229 = scalar_lea.sflag [#allocation7], %s228
        %s230 = sand.u32 %s74, 1
        %s231 = smul.addr %s230, 16
        %s232 = scalar_lea.vmem [#allocation6], %s231
        %p233 = pneg %p87
        %p234 = pneg %p84
        %p235 = pneg %p113
        %p236 = pneg %p110
        %s237 = smul.u32 %s24, 2
        %s238 = sadd.s32 %s237, %s25
        %s239 = smul.u32 2, %s238
        %s240 = ssub.s32 3, %s239
        %p241 = scmp.lt.s32.totalorder %s240, 2
        %s242 = scalar_select %p241, %s240, 2
        %s243 = smul.u32 8, %s242
        %s244 = smul.u32 %s24, 2
        %s245 = sadd.s32 %s244, %s25
        %s246 = smul.u32 2, %s245
        %s247 = ssub.s32 3, %s246
        %p248 = scmp.lt.s32.totalorder %s247, 2
        %s249 = scalar_select %p248, %s247, 2
        %s250 = smul.u32 8, %s249
        %p251 = scmp.eq.s32.totalorder %s25, 0
        // Predicated region
        $region37: #{tpu_custom_call.1} parent=27 // pred_check
          %p252 = pneg %p251
        $region38: #{tpu_custom_call.1} parent=27 // pred_check_branch
          %254 = sbr.rel (%p252) target = $region40
        $region39: #{tpu_custom_call.1} parent=27 // pred_region
          %255 = vst [vmem:[#allocation2] sm:$0xff] 0.0
        $region40: #{tpu_custom_call.1} parent=27 // pred_fallthru
          _
        %v256 = vld [vmem:[%s205] sm:$0xff]
        %v257 = vld [vmem:[%s205 + $0x8] sm:$0xff]
        %v258 = vld [vmem:[%s215] sm:$0xff]
        %v259 = vld [vmem:[%s215 + $0x8] sm:$0xff]
        %v260 = vsub.f32 %v258, %v256
        %v261 = vsub.f32 %v259, %v257
        %v262 = vmax.f32 %v260, 0.0
        %v263 = vmax.f32 %v261, 0.0
        %v264 = vand.u32 2147483647, %v260
        %v265 = vand.u32 2147483647, %v261
        %v266 = vsub.f32 0.0, %v264
        %v267 = vsub.f32 0.0, %v265
        %v268 = vmul.f32 %v266, 1.442695
        %v269 = vpow.pop %v268
        %v270 = vmul.f32 %v267, 1.442695
        %v271 = vpow.pop %v270
        %v272 = vadd.f32 %v269, 1.0
        %v273 = vadd.f32 %v271, 1.0
        %v274 = vlog2.pop %v272
        %v275 = vmul.f32 %v274, 0.6931472
        %v276 = vlog2.pop %v273
        %v277 = vmul.f32 %v276, 0.6931472
        %v278 = vadd.f32 %v262, %v275
        %v279 = vadd.f32 %v263, %v277
        %s280 = smul.u32 %s24, 2
        %s281 = sadd.s32 %s280, %s25
        %s282 = smul.u32 %s281, 16
        %s283 = ssub.s32 23, %s282
        %v284 = vlaneseq
        %v285 = vshrl.u32 %v284, 7
        %v286 = vadd.s32 %v285, 8
        %v287 = vstv %s283
        %vm288 = vcmp.lt.s32.totalorder %v285, %v287
        %vm289 = vcmp.lt.s32.totalorder %v286, %v287
        %v290 = vsel %vm288, 1, 0
        %v291 = vsel %vm289, 1, 0
        %vm292 = vcmp.eq.s32.totalorder %v290, 1
        %vm293 = vcmp.eq.s32.totalorder %v291, 1
        %v294 = vsel %vm292, %v278, 0.0
        %v295 = vsel %vm293, %v279, 0.0
        %v296 = vld [vmem:[#allocation2] sm:$0xff]
        %v297 = vadd.f32 %v294, %v295
        %v298 = vadd.f32 %v296, %v297
        %299 = vst [vmem:[#allocation2] sm:$0xff] %v298
        %p300 = scmp.eq.s32.totalorder %s25, 1
        // Predicated region
        $region41: #{tpu_custom_call.1} parent=27 // pred_check
          %p301 = pneg %p300
        $region42: #{tpu_custom_call.1} parent=27 // pred_check_branch
          %303 = sbr.rel (%p301) target = $region44
        $region43: #{tpu_custom_call.1} parent=27 // pred_region
          %v304 = vld [vmem:[#allocation2] sm:$0xff]
          %305 = vadd.xlane.f32.xlu0 %v304
          %v306 = vpop.xlane.xlu0 %305
          %v307 = vrot.slane %v306, 4
          %v308 = vadd.f32 %v306, %v307
          %v309 = vrot.slane %v308, 2
          %v310 = vadd.f32 %v308, %v309
          %v311 = vrot.slane %v310, 1
          %v312 = vadd.f32 %v310, %v311
          %s313 = vtos %v312
          %v314 = vstv %s313
          %v315 = vadd.f32 %v314, 0.0
          %316 = vst [vmem:[#allocation8] sm:$0xff] %v315
        $region44: #{tpu_custom_call.1} parent=27 // pred_fallthru
          _
        // Predicated region
        $region45: #{tpu_custom_call.1} parent=27 // pred_check
          %p317 = pneg %p110
        $region46: #{tpu_custom_call.1} parent=27 // pred_check_branch
          %319 = sbr.rel (%p317) target = $region48
        $region47: #{tpu_custom_call.1} parent=27 // pred_region
          %321 = vsyncadd [#allocation5], 0
          %s322 = smul.addr %s24, 8
          %s323 = scalar_lea.hbm %s2, %s322
          %s325 = sshll.u32 [#allocation8], 4
          %s326 = int_to_ptr.vmem [resolvable:$true] %s325
          %s327 = sshll.u32 %s323, 4
          %s328 = int_to_ptr.hbm [resolvable:$true] %s327
          %330 = dma.vmem_to_hbm [thread:$0]  %s326, 128, %s328, [#allocation5]
        $region48: #{tpu_custom_call.1} parent=27 // pred_fallthru
          _
        // Predicated region
        $region49: #{tpu_custom_call.1} parent=27 // pred_check
          %p331 = pneg %p110
        $region50: #{tpu_custom_call.1} parent=27 // pred_check_branch
          %333 = sbr.rel (%p331) target = $region52
        $region51: #{tpu_custom_call.1} parent=27 // pred_region
          %335 = dma.done [#allocation5], 128
        $region52: #{tpu_custom_call.1} parent=27 // pred_fallthru
          _
      $region28: #{tpu_custom_call.1} parent=5 // pred_fallthru
        _
      %p336 = scmp.le.s32.totalorder 2, %s15
      // Predicated region
      $region53: #{tpu_custom_call.1} parent=5 // pred_check
        %p337 = pneg %p336
      $region54: #{tpu_custom_call.1} parent=5 // pred_check_branch
        %339 = sbr.rel (%p337) target = $region56
      $region55: #{tpu_custom_call.1} parent=5 // pred_region
        %s340 = ssub.s32 %s15, 2
      $region56: #{tpu_custom_call.1} parent=5 // pred_fallthru
        _
    $region6: #{tpu_custom_call.1} parent=1 // loop_footer
      %s19 = sadd.s32 1, %s15
    $region7: #{tpu_custom_call.1} parent=1 // loop_footer_branch
      %14 = sbr.rel target = $region3
    $region8: #{tpu_custom_call.1} parent=1 // loop_exit
      _
    %341 = vsyncpa [#allocation4], 1
    %s342 = scalar_lea.sflag [#allocation4], 1
    %343 = vsyncpa %s342, 1
    %344 = vsyncpa [#allocation7], 1
    %s345 = scalar_lea.sflag [#allocation7], 1
    %346 = vsyncpa %s345, 1
    %347 = vsyncpa [#allocation5], 1
    %s348 = scalar_lea.sflag [#allocation5], 1
    %349 = vsyncpa %s348, 1

</llo_original>
